<compile_context>
chip_gen: v7x
topology: tpu7x:2x2x1
jax: 0.10.0
libtpu: 0.0.40
codegen_flags: <defaults>
</compile_context>

<pallas_src>
import math

import jax
import jax.numpy as jnp
from jax.experimental import pallas as pl
from jax.experimental.pallas import tpu as pltpu

_BN_EPS = 1e-5


def _batchnorm(x, gamma, beta, eps=_BN_EPS):
    """Training-mode BatchNorm1d, single pass (biased batch statistics)."""
    m = x.shape[0]
    inv_m = 1.0 / m
    s = jnp.sum(x, axis=0, keepdims=True)
    ss = jnp.sum(x * x, axis=0, keepdims=True)
    mean = s * inv_m
    var = ss * inv_m - mean * mean
    scale = gamma * jax.lax.rsqrt(var + eps)     # fused per-column scale
    shift = beta - mean * scale                  # fused per-column shift
    return x * scale + shift


def _graphconv_kernel(a_ref, f_ref, w1_ref, g1_ref, be1_ref,
                      w2_ref, g2_ref, be2_ref, out_ref):
    # --- aggregation: ONE MXU wave --------------------------------------------
    # a_ref = kron(I_b, A) as (b*n, b*n) bf16, f_ref = features.view(b*n, d)
    # bf16; result accumulates in f32 and stays in registers (no scratch).
    x = jnp.dot(a_ref[...], f_ref[...], preferred_element_type=jnp.float32)

    # --- MLP layer 0: Linear (bias dropped, see header) -> BN -> ReLU ----------
    h = jnp.dot(x.astype(jnp.bfloat16), w1_ref[...],
                preferred_element_type=jnp.float32)
    h = jnp.maximum(_batchnorm(h, g1_ref[...], be1_ref[...]), 0.0)

    # --- MLP layer 1 (final Linear), then GraphConv's own BN + ReLU ------------
    y = jnp.dot(h.astype(jnp.bfloat16), w2_ref[...],
                preferred_element_type=jnp.float32)
    out = jnp.maximum(_batchnorm(y, g2_ref[...], be2_ref[...]), 0.0)
    out_ref[...] = out.astype(out_ref.dtype)


def graph_conv(features, A, t, params):
    """Fused Pallas forward of GraphConv(num_layers=2, in_dim, hidden, out)."""
    del t  # unused by the PyTorch module's forward as well
    b, n, d = features.shape
    hidden = params["W1"].shape[1]
    out_dim = params["W2"].shape[1]

    # Batched bmm with a batch-shared A == block-diagonal matmul on the
    # flattened (b*n, d) features.  Built wrapper-side (layout plumbing only).
    a_block = jnp.kron(jnp.eye(b, dtype=jnp.float32), A.astype(jnp.float32))

    operands = (
        a_block.astype(jnp.bfloat16),
        features.reshape(b * n, d).astype(jnp.bfloat16),
        params["W1"].astype(jnp.bfloat16),
        params["bn1_gamma"].astype(jnp.float32),
        params["bn1_beta"].astype(jnp.float32),
        params["W2"].astype(jnp.bfloat16),
        params["bn2_gamma"].astype(jnp.float32),
        params["bn2_beta"].astype(jnp.float32),
    )

    m = b * n
    flops = (2 * m * m * d            # block-diagonal aggregation matmul
             + 2 * m * d * hidden     # MLP layer 0
             + 2 * m * hidden * out_dim)  # MLP layer 1
    bytes_accessed = sum(int(x.size) * x.dtype.itemsize for x in operands)
    bytes_accessed += m * out_dim * 4
    cost = pl.CostEstimate(flops=flops,
                           transcendentals=hidden + out_dim,  # two rsqrt rows
                           bytes_accessed=bytes_accessed)

    vmem = pl.BlockSpec(memory_space=pltpu.MemorySpace.VMEM)
    out2d = pl.pallas_call(
        _graphconv_kernel,
        out_shape=jax.ShapeDtypeStruct((m, out_dim), jnp.float32),
        in_specs=[vmem] * len(operands),
        out_specs=vmem,
        cost_estimate=cost,
    )(*operands)
    return out2d.reshape(b, n, out_dim)


def init_params(key, in_dim, hidden_dim, out_dim, dtype=jnp.float32):
    """Matches GraphConv.__init__: xavier_uniform_ weights, zero Linear biases
    (dropped here: zero at init AND cancelled by training-mode BatchNorm),
    default BatchNorm1d affine params (gamma=1, beta=0)."""
    k1, k2 = jax.random.split(key)

    def xavier(k, fan_in, fan_out):
        bound = math.sqrt(6.0 / (fan_in + fan_out))
        return jax.random.uniform(k, (fan_in, fan_out), dtype, -bound, bound)

    return {
        "W1": xavier(k1, in_dim, hidden_dim),
        "bn1_gamma": jnp.ones((1, hidden_dim), dtype),
        "bn1_beta": jnp.zeros((1, hidden_dim), dtype),
        "W2": xavier(k2, hidden_dim, out_dim),
        "bn2_gamma": jnp.ones((1, out_dim), dtype),
        "bn2_beta": jnp.zeros((1, out_dim), dtype),
    }


def _reference(features, A, params):
    """Pure-JAX f32 reference mirroring the PyTorch forward (biases are 0)."""
    b, n, d = features.shape
    hi = jax.lax.Precision.HIGHEST

    def bn(x, gamma, beta, eps=_BN_EPS):
        mean = jnp.mean(x, axis=0, keepdims=True)
        var = jnp.mean(jnp.square(x - mean), axis=0, keepdims=True)
        return (x - mean) * jax.lax.rsqrt(var + eps) * gamma + beta

    agg = jnp.einsum("nm,bmd->bnd", A, features, precision=hi)
    x = agg.reshape(b * n, d)
    h = jnp.dot(x, params["W1"], precision=hi)
    h = jnp.maximum(bn(h, params["bn1_gamma"], params["bn1_beta"]), 0.0)
    y = jnp.dot(h, params["W2"], precision=hi)
    y = jnp.maximum(bn(y, params["bn2_gamma"], params["bn2_beta"]), 0.0)
    return y.reshape(b, n, -1)


if __name__ == "__main__":
    # Small shapes consistent with the forward: b graphs of n nodes, d features.
    # hidden/out picked as multiples of 128 (lane-dense, per perf review).
    b, n = 4, 16
    in_dim, hidden_dim, out_dim = 16, 128, 128

    key = jax.random.PRNGKey(0)
    k_p, k_f, k_a = jax.random.split(key, 3)

    params = init_params(k_p, in_dim, hidden_dim, out_dim)
    features = jax.random.normal(k_f, (b, n, in_dim), jnp.float32)

    # random symmetric 0/1 adjacency with self-loops
    rand = jax.random.uniform(k_a, (n, n))
    A = ((rand + rand.T) * 0.5 < 0.4).astype(jnp.float32)
    A = jnp.minimum(A + jnp.eye(n, dtype=jnp.float32), 1.0)

    out = graph_conv(features, A, t=0, params=params)
    jax.block_until_ready(out)

    ref = _reference(features, A, params)
    assert out.shape == (b, n, out_dim)
    max_err = float(jnp.max(jnp.abs(out - ref)))
    # bf16 MXU inputs vs. a f32 HIGHEST-precision reference -> bf16-level tol.
    assert jnp.allclose(out, ref, atol=5e-2, rtol=5e-2), max_err
    print("KERNEL_OK")
</pallas_src>

<mosaic_0001>
module attributes {stable_mosaic.version = 11 : i64} {
  func.func @_graphconv_kernel(%arg0: memref<64x64xbf16, #tpu.memory_space<vmem>>, %arg1: memref<64x16xbf16, #tpu.memory_space<vmem>>, %arg2: memref<16x128xbf16, #tpu.memory_space<vmem>>, %arg3: memref<1x128xf32, #tpu.memory_space<vmem>>, %arg4: memref<1x128xf32, #tpu.memory_space<vmem>>, %arg5: memref<128x128xbf16, #tpu.memory_space<vmem>>, %arg6: memref<1x128xf32, #tpu.memory_space<vmem>>, %arg7: memref<1x128xf32, #tpu.memory_space<vmem>>, %arg8: memref<64x128xf32, #tpu.memory_space<vmem>>) attributes {dimension_semantics = [], scalar_prefetch = 0 : i64, scratch_operands = 0 : i64, tpu.core_type = #tpu.core_type<tc>} {
    %c0 = arith.constant 0 : index
    %c0_0 = arith.constant 0 : index
    %0 = vector.load %arg0[%c0, %c0_0] : memref<64x64xbf16, #tpu.memory_space<vmem>>, vector<64x64xbf16>
    %c0_1 = arith.constant 0 : index
    %c0_2 = arith.constant 0 : index
    %1 = vector.load %arg1[%c0_1, %c0_2] : memref<64x16xbf16, #tpu.memory_space<vmem>>, vector<64x16xbf16>
    %cst = arith.constant dense<0.000000e+00> : vector<64x16xf32>
    %2 = tpu.matmul %0, %1, %cst {dimension_numbers = #tpu.dot_dimension_numbers<[1], [0], [0], [1], [0, 0, 1, 1], [], []>} : vector<64x64xbf16>, vector<64x16xbf16>, vector<64x16xf32> -> vector<64x16xf32>
    %3 = arith.truncf %2 : vector<64x16xf32> to vector<64x16xbf16>
    %c0_3 = arith.constant 0 : index
    %c0_4 = arith.constant 0 : index
    %4 = vector.load %arg2[%c0_3, %c0_4] : memref<16x128xbf16, #tpu.memory_space<vmem>>, vector<16x128xbf16>
    %cst_5 = arith.constant dense<0.000000e+00> : vector<64x128xf32>
    %5 = tpu.matmul %3, %4, %cst_5 {dimension_numbers = #tpu.dot_dimension_numbers<[1], [0], [0], [1], [0, 0, 1, 1], [], []>} : vector<64x16xbf16>, vector<16x128xbf16>, vector<64x128xf32> -> vector<64x128xf32>
    %c0_6 = arith.constant 0 : index
    %c0_7 = arith.constant 0 : index
    %6 = vector.load %arg3[%c0_6, %c0_7] : memref<1x128xf32, #tpu.memory_space<vmem>>, vector<1x128xf32>
    %c0_8 = arith.constant 0 : index
    %c0_9 = arith.constant 0 : index
    %7 = vector.load %arg4[%c0_8, %c0_9] : memref<1x128xf32, #tpu.memory_space<vmem>>, vector<1x128xf32>
    %cst_10 = arith.constant dense<0.000000e+00> : vector<128xf32>
    %8 = vector.multi_reduction <add>, %5, %cst_10 [0] : vector<64x128xf32> to vector<128xf32>
    %9 = vector.shape_cast %8 : vector<128xf32> to vector<1x128xf32>
    %10 = arith.mulf %5, %5 : vector<64x128xf32>
    %cst_11 = arith.constant dense<0.000000e+00> : vector<128xf32>
    %11 = vector.multi_reduction <add>, %10, %cst_11 [0] : vector<64x128xf32> to vector<128xf32>
    %12 = vector.shape_cast %11 : vector<128xf32> to vector<1x128xf32>
    %cst_12 = arith.constant 1.562500e-02 : f32
    %13 = vector.broadcast %cst_12 : f32 to vector<1x128xf32>
    %14 = arith.mulf %9, %13 : vector<1x128xf32>
    %cst_13 = arith.constant 1.562500e-02 : f32
    %15 = vector.broadcast %cst_13 : f32 to vector<1x128xf32>
    %16 = arith.mulf %12, %15 : vector<1x128xf32>
    %17 = arith.mulf %14, %14 : vector<1x128xf32>
    %18 = arith.subf %16, %17 : vector<1x128xf32>
    %cst_14 = arith.constant 9.99999974E-6 : f32
    %19 = vector.broadcast %cst_14 : f32 to vector<1x128xf32>
    %20 = arith.addf %18, %19 : vector<1x128xf32>
    %21 = math.rsqrt %20 : vector<1x128xf32>
    %22 = arith.mulf %6, %21 : vector<1x128xf32>
    %23 = arith.mulf %14, %22 : vector<1x128xf32>
    %24 = arith.subf %7, %23 : vector<1x128xf32>
    %25 = vector.broadcast %22 : vector<1x128xf32> to vector<64x128xf32>
    %26 = arith.mulf %5, %25 : vector<64x128xf32>
    %27 = vector.broadcast %24 : vector<1x128xf32> to vector<64x128xf32>
    %28 = arith.addf %26, %27 : vector<64x128xf32>
    %cst_15 = arith.constant 0.000000e+00 : f32
    %29 = vector.broadcast %cst_15 : f32 to vector<64x128xf32>
    %30 = arith.maximumf %28, %29 : vector<64x128xf32>
    %31 = arith.truncf %30 : vector<64x128xf32> to vector<64x128xbf16>
    %c0_16 = arith.constant 0 : index
    %c0_17 = arith.constant 0 : index
    %32 = vector.load %arg5[%c0_16, %c0_17] : memref<128x128xbf16, #tpu.memory_space<vmem>>, vector<128x128xbf16>
    %cst_18 = arith.constant dense<0.000000e+00> : vector<64x128xf32>
    %33 = tpu.matmul %31, %32, %cst_18 {dimension_numbers = #tpu.dot_dimension_numbers<[1], [0], [0], [1], [0, 0, 1, 1], [], []>} : vector<64x128xbf16>, vector<128x128xbf16>, vector<64x128xf32> -> vector<64x128xf32>
    %c0_19 = arith.constant 0 : index
    %c0_20 = arith.constant 0 : index
    %34 = vector.load %arg6[%c0_19, %c0_20] : memref<1x128xf32, #tpu.memory_space<vmem>>, vector<1x128xf32>
    %c0_21 = arith.constant 0 : index
    %c0_22 = arith.constant 0 : index
    %35 = vector.load %arg7[%c0_21, %c0_22] : memref<1x128xf32, #tpu.memory_space<vmem>>, vector<1x128xf32>
    %cst_23 = arith.constant dense<0.000000e+00> : vector<128xf32>
    %36 = vector.multi_reduction <add>, %33, %cst_23 [0] : vector<64x128xf32> to vector<128xf32>
    %37 = vector.shape_cast %36 : vector<128xf32> to vector<1x128xf32>
    %38 = arith.mulf %33, %33 : vector<64x128xf32>
    %cst_24 = arith.constant dense<0.000000e+00> : vector<128xf32>
    %39 = vector.multi_reduction <add>, %38, %cst_24 [0] : vector<64x128xf32> to vector<128xf32>
    %40 = vector.shape_cast %39 : vector<128xf32> to vector<1x128xf32>
    %cst_25 = arith.constant 1.562500e-02 : f32
    %41 = vector.broadcast %cst_25 : f32 to vector<1x128xf32>
    %42 = arith.mulf %37, %41 : vector<1x128xf32>
    %cst_26 = arith.constant 1.562500e-02 : f32
    %43 = vector.broadcast %cst_26 : f32 to vector<1x128xf32>
    %44 = arith.mulf %40, %43 : vector<1x128xf32>
    %45 = arith.mulf %42, %42 : vector<1x128xf32>
    %46 = arith.subf %44, %45 : vector<1x128xf32>
    %cst_27 = arith.constant 9.99999974E-6 : f32
    %47 = vector.broadcast %cst_27 : f32 to vector<1x128xf32>
    %48 = arith.addf %46, %47 : vector<1x128xf32>
    %49 = math.rsqrt %48 : vector<1x128xf32>
    %50 = arith.mulf %34, %49 : vector<1x128xf32>
    %51 = arith.mulf %42, %50 : vector<1x128xf32>
    %52 = arith.subf %35, %51 : vector<1x128xf32>
    %53 = vector.broadcast %50 : vector<1x128xf32> to vector<64x128xf32>
    %54 = arith.mulf %33, %53 : vector<64x128xf32>
    %55 = vector.broadcast %52 : vector<1x128xf32> to vector<64x128xf32>
    %56 = arith.addf %54, %55 : vector<64x128xf32>
    %cst_28 = arith.constant 0.000000e+00 : f32
    %57 = vector.broadcast %cst_28 : f32 to vector<64x128xf32>
    %58 = arith.maximumf %56, %57 : vector<64x128xf32>
    %c0_29 = arith.constant 0 : index
    %c0_30 = arith.constant 0 : index
    %59 = vector.load %arg8[%c0_29, %c0_30] : memref<64x128xf32, #tpu.memory_space<vmem>>, vector<64x128xf32>
    tpu.vector_store %arg8[%c0_29, %c0_30], %58 {strides = array<i32>} : memref<64x128xf32, #tpu.memory_space<vmem>>, vector<64x128xf32>,
    return
  }
}

</mosaic_0001>

<llo_original>
// kernel: tpu_custom_call.1
$region0: #{tpu_custom_call.1}
  #allocation0 [shape = 'u32[]', space=smem, size = 0x4, offset = 0x4, fixed_abs, tag = 'smem constant byte address 0x4 - core index']
  #allocation1 [shape = 'u32[144,128]{1,0:T(1,128)}', space=vmem, size = 0x12000, scoped, tag = 'internal scratch']
  %s0 = inlined_call_operand.vmem [shape: bf16[64,64], index: 0, kind: input, shape index: {}]
  %s1 = inlined_call_operand.vmem [shape: bf16[64,16], index: 1, kind: input, shape index: {}]
  %s2 = inlined_call_operand.vmem [shape: bf16[16,128], index: 2, kind: input, shape index: {}]
  %s3 = inlined_call_operand.vmem [shape: f32[1,128], index: 3, kind: input, shape index: {}]
  %s4 = inlined_call_operand.vmem [shape: f32[1,128], index: 4, kind: input, shape index: {}]
  %s5 = inlined_call_operand.hbm [shape: bf16[128,128], index: 5, kind: input, shape index: {}]
  %s6 = inlined_call_operand.vmem [shape: f32[1,128], index: 6, kind: input, shape index: {}]
  %s7 = inlined_call_operand.vmem [shape: f32[1,128], index: 7, kind: input, shape index: {}]
  %s8 = inlined_call_operand.hbm [shape: f32[64,128], index: 8, kind: output, shape index: {}]
  %s9 = sld [smem:[#allocation0]]
  $region46: #{tpu_custom_call.1} parent=0
    _
  %s11 = ssub.s32 1, %s9
  %s12 = scalar_select 0, %s11, %s9
  $region1: #{tpu_custom_call.1} parent=0
    #allocation2 [shape = 'u8[32768]{0}', space=vmem, size = 0x8000, scoped, tag = 'input window, operand 5, single buffered']
    #allocation3 [shape = 's32[1]{0}', space=sflag, size = 0x4, scoped, tag = 'scoped memory for tpu_custom_call.1']
    #allocation4 [shape = 's32[1]{0}', space=sflag, size = 0x4, scoped, tag = 'scoped memory for tpu_custom_call.1']
    #allocation5 [shape = 'u8[32768]{0}', space=vmem, size = 0x8000, scoped, tag = 'output window, operand 0, single buffered']
    %13 = vsyncpa [#allocation3], 0
    %14 = vsyncpa [#allocation4], 0
    // Predicated region
    $region2: #{tpu_custom_call.1} parent=1 // pred_check
      _
    $region3: #{tpu_custom_call.1} parent=1 // pred_check_branch
      %16 = sbr.rel (0) target = $region5
    $region4: #{tpu_custom_call.1} parent=1 // pred_region
      _
    $region5: #{tpu_custom_call.1} parent=1 // pred_fallthru
      _
    // Predicated region
    $region6: #{tpu_custom_call.1} parent=1 // pred_check
      _
    $region7: #{tpu_custom_call.1} parent=1 // pred_check_branch
      %18 = sbr.rel (0) target = $region9
    $region8: #{tpu_custom_call.1} parent=1 // pred_region
      _
    $region9: #{tpu_custom_call.1} parent=1 // pred_fallthru
      _
    // Predicated region
    $region10: #{tpu_custom_call.1} parent=1 // pred_check
      _
    $region11: #{tpu_custom_call.1} parent=1 // pred_check_branch
      %20 = sbr.rel (0) target = $region13
    $region12: #{tpu_custom_call.1} parent=1 // pred_region
      _
    $region13: #{tpu_custom_call.1} parent=1 // pred_fallthru
      _
    // Predicated region
    $region14: #{tpu_custom_call.1} parent=1 // pred_check
      _
    $region15: #{tpu_custom_call.1} parent=1 // pred_check_branch
      %22 = sbr.rel (0) target = $region17
    $region16: #{tpu_custom_call.1} parent=1 // pred_region
      _
    $region17: #{tpu_custom_call.1} parent=1 // pred_fallthru
      _
    // Predicated region
    $region18: #{tpu_custom_call.1} parent=1 // pred_check
      _
    $region19: #{tpu_custom_call.1} parent=1 // pred_check_branch
      %24 = sbr.rel (0) target = $region21
    $region20: #{tpu_custom_call.1} parent=1 // pred_region
      _
    $region21: #{tpu_custom_call.1} parent=1 // pred_fallthru
      _
    // Predicated region
    $region22: #{tpu_custom_call.1} parent=1 // pred_check
      _
    $region23: #{tpu_custom_call.1} parent=1 // pred_check_branch
      %26 = sbr.rel (0) target = $region25
    $region24: #{tpu_custom_call.1} parent=1 // pred_region
      %s28 = ssub.s32 1024, 1024
      %29 = vsyncadd [#allocation3], %s28
      %s30 = sshll.u32 [#allocation2], 4
      %s31 = int_to_ptr.vmem [resolvable:$true] %s30
      %36 = dma.hbm_to_vmem [thread:$0]  %s5, 1024, %s31, [#allocation3], 64, 64, 4
    $region25: #{tpu_custom_call.1} parent=1 // pred_fallthru
      _
    // Predicated region
    $region26: #{tpu_custom_call.1} parent=1 // pred_check
      _
    $region27: #{tpu_custom_call.1} parent=1 // pred_check_branch
      %38 = sbr.rel (0) target = $region29
    $region28: #{tpu_custom_call.1} parent=1 // pred_region
      _
    $region29: #{tpu_custom_call.1} parent=1 // pred_fallthru
      _
    // Predicated region
    $region30: #{tpu_custom_call.1} parent=1 // pred_check
      _
    $region31: #{tpu_custom_call.1} parent=1 // pred_check_branch
      %40 = sbr.rel (0) target = $region33
    $region32: #{tpu_custom_call.1} parent=1 // pred_region
      _
    $region33: #{tpu_custom_call.1} parent=1 // pred_fallthru
      _
    // Predicated region
    $region34: #{tpu_custom_call.1} parent=1 // pred_check
      _
    $region35: #{tpu_custom_call.1} parent=1 // pred_check_branch
      %42 = sbr.rel (0) target = $region37
    $region36: #{tpu_custom_call.1} parent=1 // pred_region
      %43 = dma.done [#allocation3], 1024
    $region37: #{tpu_custom_call.1} parent=1 // pred_fallthru
      _
    %v45 = vld [vmem:[%s0] sm:$0xf]
    %v46 = vld [vmem:[%s0 + $0x4] sm:$0xf]
    %v47 = vld [vmem:[%s0 + $0x8] sm:$0xf]
    %v48 = vld [vmem:[%s0 + $0xc] sm:$0xf]
    %v49 = vld [vmem:[%s0 + $0x10] sm:$0xf]
    %v50 = vld [vmem:[%s0 + $0x14] sm:$0xf]
    %v51 = vld [vmem:[%s0 + $0x18] sm:$0xf]
    %v52 = vld [vmem:[%s0 + $0x1c] sm:$0xf]
    %v53 = vld [vmem:[%s1] sm:$0xf]
    %v54 = vld [vmem:[%s1 + $0x4] sm:$0xf]
    %v55 = vld [vmem:[%s1 + $0x8] sm:$0xf]
    %v56 = vld [vmem:[%s1 + $0xc] sm:$0xf]
    %v57 = vld [vmem:[%s1 + $0x10] sm:$0xf]
    %v58 = vld [vmem:[%s1 + $0x14] sm:$0xf]
    %v59 = vld [vmem:[%s1 + $0x18] sm:$0xf]
    %v60 = vld [vmem:[%s1 + $0x1c] sm:$0xf]
    %v69 = vunpack.c.l.b16 %v45
    %v70 = vunpack.c.l.b16 %v46
    %v71 = vunpack.c.l.b16 %v47
    %v72 = vunpack.c.l.b16 %v48
    %v73 = vunpack.c.l.b16 %v49
    %v74 = vunpack.c.l.b16 %v50
    %v75 = vunpack.c.l.b16 %v51
    %v76 = vunpack.c.l.b16 %v52
    %v77 = vpack.c.b16 %v70, %v69
    %v78 = vpack.c.b16 %v72, %v71
    %v79 = vpack.c.b16 %v74, %v73
    %v80 = vpack.c.b16 %v76, %v75
    %v89 = vunpack.c.l.b16 %v53
    %v90 = vunpack.c.l.b16 %v54
    %v91 = vunpack.c.l.b16 %v55
    %v92 = vunpack.c.l.b16 %v56
    %v93 = vunpack.c.l.b16 %v57
    %v94 = vunpack.c.l.b16 %v58
    %v95 = vunpack.c.l.b16 %v59
    %v96 = vunpack.c.l.b16 %v60
    %v97 = vpack.c.b16 %v90, %v89
    %v98 = vpack.c.b16 %v92, %v91
    %v99 = vpack.c.b16 %v94, %v93
    %v100 = vpack.c.b16 %v96, %v95
    %vm105 = vcmask 523264
    %v107 = vsel %vm105, %v77, 0
    %v110 = vsel %vm105, %v78, 0
    %v113 = vsel %vm105, %v79, 0
    %v116 = vsel %vm105, %v80, 0
    %118 = vmatprep.subr.bf16.mxu0 0
    %119 = vmatpush1.bf16.msra.mxu0 %v97
    %120 = vmatprep.subr.bf16.mxu0 0
    %121 = vmatpush1.bf16.msra.mxu0 %v98
    %122 = vmatprep.subr.bf16.mxu0 0
    %123 = vmatpush1.bf16.msra.mxu0 %v99
    %124 = vmatprep.subr.bf16.mxu0 0
    %125 = vmatpush1.bf16.msra.mxu0 %v100
    %126 = vmatprep.subr.bf16.mxu0 0
    %127 = vmatpush1.bf16.msra.mxu0 0
    %128 = vmatprep.subr.bf16.mxu0 0
    %129 = vmatpush1.bf16.msra.mxu0 0
    %130 = vmatprep.subr.bf16.mxu0 0
    %131 = vmatpush1.bf16.msra.mxu0 0
    %132 = vmatprep.subr.bf16.mxu0 0
    %133 = vmatpush1.bf16.msra.mxu0 0
    %134 = vmatprep.subr.bf16.mxu0 0
    %135 = vmatpush1.bf16.msra.mxu0 0
    %136 = vmatprep.subr.bf16.mxu0 0
    %137 = vmatpush1.bf16.msra.mxu0 0
    %138 = vmatprep.subr.bf16.mxu0 0
    %139 = vmatpush1.bf16.msra.mxu0 0
    %140 = vmatprep.subr.bf16.mxu0 0
    %141 = vmatpush1.bf16.msra.mxu0 0
    %142 = vmatprep.subr.bf16.mxu0 0
    %143 = vmatpush1.bf16.msra.mxu0 0
    %144 = vmatprep.subr.bf16.mxu0 0
    %145 = vmatpush1.bf16.msra.mxu0 0
    %146 = vmatprep.subr.bf16.mxu0 0
    %147 = vmatpush1.bf16.msra.mxu0 0
    %148 = vmatprep.subr.bf16.mxu0 0
    %149 = vmatpush1.bf16.msra.mxu0 0
    %150 = vmatprep.mubr.bf16.mxu0 0
    %151 = vmatmul.mubr.bf16.gmra.mrb[0].mxu0 %v107
    %v152 = vpop.f32.mrb[0].mxu0
    %v153 = vadd.f32 0.0, %v152
    %v154 = vpop.f32.mrb[0].mxu0
    %v155 = vpop.f32.mrb[0].mxu0
    %v156 = vadd.f32 0.0, %v155
    %v157 = vpop.f32.mrb[0].mxu0
    %158 = vmatprep.mubr.bf16.mxu0 0
    %159 = vmatmul.mubr.bf16.gmra.mrb[0].mxu0 %v110
    %v160 = vpop.f32.mrb[0].mxu0
    %v161 = vadd.f32 0.0, %v160
    %v162 = vpop.f32.mrb[0].mxu0
    %v163 = vpop.f32.mrb[0].mxu0
    %v164 = vadd.f32 0.0, %v163
    %v165 = vpop.f32.mrb[0].mxu0
    %166 = vmatprep.mubr.bf16.mxu0 0
    %167 = vmatmul.mubr.bf16.gmra.mrb[0].mxu0 %v113
    %v168 = vpop.f32.mrb[0].mxu0
    %v169 = vadd.f32 0.0, %v168
    %v170 = vpop.f32.mrb[0].mxu0
    %v171 = vpop.f32.mrb[0].mxu0
    %v172 = vadd.f32 0.0, %v171
    %v173 = vpop.f32.mrb[0].mxu0
    %174 = vmatprep.mubr.bf16.mxu0 0
    %175 = vmatmul.mubr.bf16.gmra.mrb[0].mxu0 %v116
    %v176 = vpop.f32.mrb[0].mxu0
    %v177 = vadd.f32 0.0, %v176
    %v178 = vpop.f32.mrb[0].mxu0
    %v179 = vpop.f32.mrb[0].mxu0
    %v180 = vadd.f32 0.0, %v179
    %v181 = vpop.f32.mrb[0].mxu0
    %182 = vdwg.mxu0
    %v183 = vpack.c.bf16 %v156, %v153
    %v184 = vpack.c.bf16 %v164, %v161
    %v185 = vpack.c.bf16 %v172, %v169
    %v186 = vpack.c.bf16 %v180, %v177
    %v187 = vld [vmem:[%s2] sm:$0xf]
    %v188 = vld [vmem:[%s2 + $0x4] sm:$0xf]
    %v191 = vunpack.c.l.b16 %v187
    %v192 = vunpack.c.l.b16 %v188
    %v193 = vpack.c.b16 %v192, %v191
    %vm195 = vcmask 130048
    %v197 = vsel %vm195, %v183, 0
    %v200 = vsel %vm195, %v184, 0
    %v203 = vsel %vm195, %v185, 0
    %v206 = vsel %vm195, %v186, 0
    %208 = vmatprep.subr.bf16.mxu0 0
    %209 = vmatpush1.bf16.msra.mxu0 %v193
    %210 = vmatprep.subr.bf16.mxu0 0
    %211 = vmatpush1.bf16.msra.mxu0 0
    %212 = vmatprep.subr.bf16.mxu0 0
    %213 = vmatpush1.bf16.msra.mxu0 0
    %214 = vmatprep.subr.bf16.mxu0 0
    %215 = vmatpush1.bf16.msra.mxu0 0
    %216 = vmatprep.subr.bf16.mxu0 0
    %217 = vmatpush1.bf16.msra.mxu0 0
    %218 = vmatprep.subr.bf16.mxu0 0
    %219 = vmatpush1.bf16.msra.mxu0 0
    %220 = vmatprep.subr.bf16.mxu0 0
    %221 = vmatpush1.bf16.msra.mxu0 0
    %222 = vmatprep.subr.bf16.mxu0 0
    %223 = vmatpush1.bf16.msra.mxu0 0
    %224 = vmatprep.subr.bf16.mxu0 0
    %225 = vmatpush1.bf16.msra.mxu0 0
    %226 = vmatprep.subr.bf16.mxu0 0
    %227 = vmatpush1.bf16.msra.mxu0 0
    %228 = vmatprep.subr.bf16.mxu0 0
    %229 = vmatpush1.bf16.msra.mxu0 0
    %230 = vmatprep.subr.bf16.mxu0 0
    %231 = vmatpush1.bf16.msra.mxu0 0
    %232 = vmatprep.subr.bf16.mxu0 0
    %233 = vmatpush1.bf16.msra.mxu0 0
    %234 = vmatprep.subr.bf16.mxu0 0
    %235 = vmatpush1.bf16.msra.mxu0 0
    %236 = vmatprep.subr.bf16.mxu0 0
    %237 = vmatpush1.bf16.msra.mxu0 0
    %238 = vmatprep.subr.bf16.mxu0 0
    %239 = vmatpush1.bf16.msra.mxu0 0
    %240 = vmatprep.mubr.bf16.mxu0 0
    %241 = vmatmul.mubr.bf16.gmra.mrb[0].mxu0 %v197
    %v242 = vpop.f32.mrb[0].mxu0
    %v243 = vadd.f32 0.0, %v242
    %v244 = vpop.f32.mrb[0].mxu0
    %v245 = vpop.f32.mrb[0].mxu0
    %v246 = vadd.f32 0.0, %v245
    %v247 = vpop.f32.mrb[0].mxu0
    %248 = vmatprep.mubr.bf16.mxu0 0
    %249 = vmatmul.mubr.bf16.gmra.mrb[0].mxu0 %v200
    %v250 = vpop.f32.mrb[0].mxu0
    %v251 = vadd.f32 0.0, %v250
    %v252 = vpop.f32.mrb[0].mxu0
    %v253 = vpop.f32.mrb[0].mxu0
    %v254 = vadd.f32 0.0, %v253
    %v255 = vpop.f32.mrb[0].mxu0
    %256 = vmatprep.mubr.bf16.mxu0 0
    %257 = vmatmul.mubr.bf16.gmra.mrb[0].mxu0 %v203
    %v258 = vpop.f32.mrb[0].mxu0
    %v259 = vadd.f32 0.0, %v258
    %v260 = vpop.f32.mrb[0].mxu0
    %v261 = vpop.f32.mrb[0].mxu0
    %v262 = vadd.f32 0.0, %v261
    %v263 = vpop.f32.mrb[0].mxu0
    %264 = vmatprep.mubr.bf16.mxu0 0
    %265 = vmatmul.mubr.bf16.gmra.mrb[0].mxu0 %v206
    %v266 = vpop.f32.mrb[0].mxu0
    %v267 = vadd.f32 0.0, %v266
    %v268 = vpop.f32.mrb[0].mxu0
    %v269 = vpop.f32.mrb[0].mxu0
    %v270 = vadd.f32 0.0, %v269
    %v271 = vpop.f32.mrb[0].mxu0
    %272 = vdwg.mxu0
    %v273 = vld [vmem:[%s3] sm:$0x1]
    %v274 = vld [vmem:[%s4] sm:$0x1]
    %v275 = vadd.f32 %v243, %v246
    %v276 = vadd.f32 %v275, %v251
    %v277 = vadd.f32 %v276, %v254
    %v278 = vadd.f32 %v277, %v259
    %v279 = vadd.f32 %v278, %v262
    %v280 = vadd.f32 %v279, %v267
    %v281 = vadd.f32 %v280, %v270
    %v282 = vrot.slane %v281, 4
    %v283 = vadd.f32 %v281, %v282
    %v284 = vrot.slane %v283, 2
    %v285 = vadd.f32 %v283, %v284
    %v286 = vrot.slane %v285, 1
    %v287 = vadd.f32 %v285, %v286
    %v288 = vmul.f32 %v243, %v243
    %v289 = vmul.f32 %v246, %v246
    %v290 = vmul.f32 %v251, %v251
    %v291 = vmul.f32 %v254, %v254
    %v292 = vmul.f32 %v259, %v259
    %v293 = vmul.f32 %v262, %v262
    %v294 = vmul.f32 %v267, %v267
    %v295 = vmul.f32 %v270, %v270
    %v296 = vadd.f32 %v288, %v289
    %v297 = vadd.f32 %v296, %v290
    %v298 = vadd.f32 %v297, %v291
    %v299 = vadd.f32 %v298, %v292
    %v300 = vadd.f32 %v299, %v293
    %v301 = vadd.f32 %v300, %v294
    %v302 = vadd.f32 %v301, %v295
    %v303 = vrot.slane %v302, 4
    %v304 = vadd.f32 %v302, %v303
    %v305 = vrot.slane %v304, 2
    %v306 = vadd.f32 %v304, %v305
    %v307 = vrot.slane %v306, 1
    %v308 = vadd.f32 %v306, %v307
    %v309 = vmul.f32 %v287, 0.015625
    %v310 = vmul.f32 %v308, 0.015625
    %v311 = vmul.f32 %v309, %v309
    %v312 = vsub.f32 %v310, %v311
    %v313 = vadd.f32 %v312, 1e-05
    %v314 = vrsqrt.pop %v313
    %v315 = vmul.f32 %v273, %v314
    %v316 = vmul.f32 %v309, %v315
    %v317 = vsub.f32 %v274, %v316
    %v319 = vlaneseq
    %v320 = vshrl.u32 %v319, 7
    %v321 = vsub.s32 0, %v320
    %v322 = vrot.slane %v315, %v321
    %v324 = vmul.f32 %v243, %v322
    %v325 = vmul.f32 %v246, %v322
    %v326 = vmul.f32 %v251, %v322
    %v327 = vmul.f32 %v254, %v322
    %v328 = vmul.f32 %v259, %v322
    %v329 = vmul.f32 %v262, %v322
    %v330 = vmul.f32 %v267, %v322
    %v331 = vmul.f32 %v270, %v322
    %v333 = vlaneseq
    %v334 = vshrl.u32 %v333, 7
    %v335 = vsub.s32 0, %v334
    %v336 = vrot.slane %v317, %v335
    %v338 = vadd.f32 %v324, %v336
    %v339 = vadd.f32 %v325, %v336
    %v340 = vadd.f32 %v326, %v336
    %v341 = vadd.f32 %v327, %v336
    %v342 = vadd.f32 %v328, %v336
    %v343 = vadd.f32 %v329, %v336
    %v344 = vadd.f32 %v330, %v336
    %v345 = vadd.f32 %v331, %v336
    %v346 = vmax.f32 %v338, 0.0
    %v347 = vmax.f32 %v339, 0.0
    %v348 = vmax.f32 %v340, 0.0
    %v349 = vmax.f32 %v341, 0.0
    %v350 = vmax.f32 %v342, 0.0
    %v351 = vmax.f32 %v343, 0.0
    %v352 = vmax.f32 %v344, 0.0
    %v353 = vmax.f32 %v345, 0.0
    %v354 = vpack.c.bf16 %v347, %v346
    %v355 = vpack.c.bf16 %v349, %v348
    %v356 = vpack.c.bf16 %v351, %v350
    %v357 = vpack.c.bf16 %v353, %v352
    %v358 = vld [vmem:[#allocation2] sm:$0xf]
    %v359 = vld [vmem:[#allocation2 + $0x4] sm:$0xf]
    %v360 = vld [vmem:[#allocation2 + $0x8] sm:$0xf]
    %v361 = vld [vmem:[#allocation2 + $0xc] sm:$0xf]
    %v362 = vld [vmem:[#allocation2 + $0x10] sm:$0xf]
    %v363 = vld [vmem:[#allocation2 + $0x14] sm:$0xf]
    %v364 = vld [vmem:[#allocation2 + $0x18] sm:$0xf]
    %v365 = vld [vmem:[#allocation2 + $0x1c] sm:$0xf]
    %v366 = vld [vmem:[#allocation2 + $0x20] sm:$0xf]
    %v367 = vld [vmem:[#allocation2 + $0x24] sm:$0xf]
    %v368 = vld [vmem:[#allocation2 + $0x28] sm:$0xf]
    %v369 = vld [vmem:[#allocation2 + $0x2c] sm:$0xf]
    %v370 = vld [vmem:[#allocation2 + $0x30] sm:$0xf]
    %v371 = vld [vmem:[#allocation2 + $0x34] sm:$0xf]
    %v372 = vld [vmem:[#allocation2 + $0x38] sm:$0xf]
    %v373 = vld [vmem:[#allocation2 + $0x3c] sm:$0xf]
    %v390 = vunpack.c.l.b16 %v358
    %v391 = vunpack.c.l.b16 %v359
    %v392 = vunpack.c.l.b16 %v360
    %v393 = vunpack.c.l.b16 %v361
    %v394 = vunpack.c.l.b16 %v362
    %v395 = vunpack.c.l.b16 %v363
    %v396 = vunpack.c.l.b16 %v364
    %v397 = vunpack.c.l.b16 %v365
    %v398 = vunpack.c.l.b16 %v366
    %v399 = vunpack.c.l.b16 %v367
    %v400 = vunpack.c.l.b16 %v368
    %v401 = vunpack.c.l.b16 %v369
    %v402 = vunpack.c.l.b16 %v370
    %v403 = vunpack.c.l.b16 %v371
    %v404 = vunpack.c.l.b16 %v372
    %v405 = vunpack.c.l.b16 %v373
    %v406 = vpack.c.b16 %v391, %v390
    %v407 = vpack.c.b16 %v393, %v392
    %v408 = vpack.c.b16 %v395, %v394
    %v409 = vpack.c.b16 %v397, %v396
    %v410 = vpack.c.b16 %v399, %v398
    %v411 = vpack.c.b16 %v401, %v400
    %v412 = vpack.c.b16 %v403, %v402
    %v413 = vpack.c.b16 %v405, %v404
    %422 = vmatprep.subr.bf16.mxu0 0
    %423 = vmatpush1.bf16.msra.mxu0 %v406
    %424 = vmatprep.subr.bf16.mxu0 0
    %425 = vmatpush1.bf16.msra.mxu0 %v407
    %426 = vmatprep.subr.bf16.mxu0 0
    %427 = vmatpush1.bf16.msra.mxu0 %v408
    %428 = vmatprep.subr.bf16.mxu0 0
    %429 = vmatpush1.bf16.msra.mxu0 %v409
    %430 = vmatprep.subr.bf16.mxu0 0
    %431 = vmatpush1.bf16.msra.mxu0 %v410
    %432 = vmatprep.subr.bf16.mxu0 0
    %433 = vmatpush1.bf16.msra.mxu0 %v411
    %434 = vmatprep.subr.bf16.mxu0 0
    %435 = vmatpush1.bf16.msra.mxu0 %v412
    %436 = vmatprep.subr.bf16.mxu0 0
    %437 = vmatpush1.bf16.msra.mxu0 %v413
    %438 = vmatprep.subr.bf16.mxu0 0
    %439 = vmatpush1.bf16.msra.mxu0 0
    %440 = vmatprep.subr.bf16.mxu0 0
    %441 = vmatpush1.bf16.msra.mxu0 0
    %442 = vmatprep.subr.bf16.mxu0 0
    %443 = vmatpush1.bf16.msra.mxu0 0
    %444 = vmatprep.subr.bf16.mxu0 0
    %445 = vmatpush1.bf16.msra.mxu0 0
    %446 = vmatprep.subr.bf16.mxu0 0
    %447 = vmatpush1.bf16.msra.mxu0 0
    %448 = vmatprep.subr.bf16.mxu0 0
    %449 = vmatpush1.bf16.msra.mxu0 0
    %450 = vmatprep.subr.bf16.mxu0 0
    %451 = vmatpush1.bf16.msra.mxu0 0
    %452 = vmatprep.subr.bf16.mxu0 0
    %453 = vmatpush1.bf16.msra.mxu0 0
    %454 = vmatprep.mubr.bf16.mxu0 0
    %455 = vmatmul.mubr.bf16.gmra.mrb[0].mxu0 %v354
    %v456 = vpop.f32.mrb[0].mxu0
    %v457 = vadd.f32 0.0, %v456
    %v458 = vpop.f32.mrb[0].mxu0
    %v459 = vpop.f32.mrb[0].mxu0
    %v460 = vadd.f32 0.0, %v459
    %v461 = vpop.f32.mrb[0].mxu0
    %462 = vmatprep.mubr.bf16.mxu0 0
    %463 = vmatmul.mubr.bf16.gmra.mrb[0].mxu0 %v355
    %v464 = vpop.f32.mrb[0].mxu0
    %v465 = vadd.f32 0.0, %v464
    %v466 = vpop.f32.mrb[0].mxu0
    %v467 = vpop.f32.mrb[0].mxu0
    %v468 = vadd.f32 0.0, %v467
    %v469 = vpop.f32.mrb[0].mxu0
    %470 = vmatprep.mubr.bf16.mxu0 0
    %471 = vmatmul.mubr.bf16.gmra.mrb[0].mxu0 %v356
    %v472 = vpop.f32.mrb[0].mxu0
    %v473 = vadd.f32 0.0, %v472
    %v474 = vpop.f32.mrb[0].mxu0
    %v475 = vpop.f32.mrb[0].mxu0
    %v476 = vadd.f32 0.0, %v475
    %v477 = vpop.f32.mrb[0].mxu0
    %478 = vmatprep.mubr.bf16.mxu0 0
    %479 = vmatmul.mubr.bf16.gmra.mrb[0].mxu0 %v357
    %v480 = vpop.f32.mrb[0].mxu0
    %v481 = vadd.f32 0.0, %v480
    %v482 = vpop.f32.mrb[0].mxu0
    %v483 = vpop.f32.mrb[0].mxu0
    %v484 = vadd.f32 0.0, %v483
    %v485 = vpop.f32.mrb[0].mxu0
    %486 = vdwg.mxu0
    %v487 = vld [vmem:[%s6] sm:$0x1]
    %v488 = vld [vmem:[%s7] sm:$0x1]
    %v489 = vadd.f32 %v457, %v460
    %v490 = vadd.f32 %v489, %v465
    %v491 = vadd.f32 %v490, %v468
    %v492 = vadd.f32 %v491, %v473
    %v493 = vadd.f32 %v492, %v476
    %v494 = vadd.f32 %v493, %v481
    %v495 = vadd.f32 %v494, %v484
    %v496 = vrot.slane %v495, 4
    %v497 = vadd.f32 %v495, %v496
    %v498 = vrot.slane %v497, 2
    %v499 = vadd.f32 %v497, %v498
    %v500 = vrot.slane %v499, 1
    %v501 = vadd.f32 %v499, %v500
    %v502 = vmul.f32 %v457, %v457
    %v503 = vmul.f32 %v460, %v460
    %v504 = vmul.f32 %v465, %v465
    %v505 = vmul.f32 %v468, %v468
    %v506 = vmul.f32 %v473, %v473
    %v507 = vmul.f32 %v476, %v476
    %v508 = vmul.f32 %v481, %v481
    %v509 = vmul.f32 %v484, %v484
    %v510 = vadd.f32 %v502, %v503
    %v511 = vadd.f32 %v510, %v504
    %v512 = vadd.f32 %v511, %v505
    %v513 = vadd.f32 %v512, %v506
    %v514 = vadd.f32 %v513, %v507
    %v515 = vadd.f32 %v514, %v508
    %v516 = vadd.f32 %v515, %v509
    %v517 = vrot.slane %v516, 4
    %v518 = vadd.f32 %v516, %v517
    %v519 = vrot.slane %v518, 2
    %v520 = vadd.f32 %v518, %v519
    %v521 = vrot.slane %v520, 1
    %v522 = vadd.f32 %v520, %v521
    %v523 = vmul.f32 %v501, 0.015625
    %v524 = vmul.f32 %v522, 0.015625
    %v525 = vmul.f32 %v523, %v523
    %v526 = vsub.f32 %v524, %v525
    %v527 = vadd.f32 %v526, 1e-05
    %v528 = vrsqrt.pop %v527
    %v529 = vmul.f32 %v487, %v528
    %v530 = vmul.f32 %v523, %v529
    %v531 = vsub.f32 %v488, %v530
    %v533 = vlaneseq
    %v534 = vshrl.u32 %v533, 7
    %v535 = vsub.s32 0, %v534
    %v536 = vrot.slane %v529, %v535
    %v538 = vmul.f32 %v457, %v536
    %v539 = vmul.f32 %v460, %v536
    %v540 = vmul.f32 %v465, %v536
    %v541 = vmul.f32 %v468, %v536
    %v542 = vmul.f32 %v473, %v536
    %v543 = vmul.f32 %v476, %v536
    %v544 = vmul.f32 %v481, %v536
    %v545 = vmul.f32 %v484, %v536
    %v547 = vlaneseq
    %v548 = vshrl.u32 %v547, 7
    %v549 = vsub.s32 0, %v548
    %v550 = vrot.slane %v531, %v549
    %v552 = vadd.f32 %v538, %v550
    %v553 = vadd.f32 %v539, %v550
    %v554 = vadd.f32 %v540, %v550
    %v555 = vadd.f32 %v541, %v550
    %v556 = vadd.f32 %v542, %v550
    %v557 = vadd.f32 %v543, %v550
    %v558 = vadd.f32 %v544, %v550
    %v559 = vadd.f32 %v545, %v550
    %v560 = vmax.f32 %v552, 0.0
    %v561 = vmax.f32 %v553, 0.0
    %v562 = vmax.f32 %v554, 0.0
    %v563 = vmax.f32 %v555, 0.0
    %v564 = vmax.f32 %v556, 0.0
    %v565 = vmax.f32 %v557, 0.0
    %v566 = vmax.f32 %v558, 0.0
    %v567 = vmax.f32 %v559, 0.0
    %568 = vst [vmem:[#allocation5] sm:$0xff] %v560
    %569 = vst [vmem:[#allocation5 + $0x8] sm:$0xff] %v561
    %570 = vst [vmem:[#allocation5 + $0x10] sm:$0xff] %v562
    %571 = vst [vmem:[#allocation5 + $0x18] sm:$0xff] %v563
    %572 = vst [vmem:[#allocation5 + $0x20] sm:$0xff] %v564
    %573 = vst [vmem:[#allocation5 + $0x28] sm:$0xff] %v565
    %574 = vst [vmem:[#allocation5 + $0x30] sm:$0xff] %v566
    %575 = vst [vmem:[#allocation5 + $0x38] sm:$0xff] %v567
    // Predicated region
    $region38: #{tpu_custom_call.1} parent=1 // pred_check
      _
    $region39: #{tpu_custom_call.1} parent=1 // pred_check_branch
      %577 = sbr.rel (0) target = $region41
    $region40: #{tpu_custom_call.1} parent=1 // pred_region
      %s579 = ssub.s32 1024, 1024
      %580 = vsyncadd [#allocation4], %s579
      %s581 = sshll.u32 [#allocation5], 4
      %s582 = int_to_ptr.vmem [resolvable:$true] %s581
      %587 = dma.vmem_to_hbm [thread:$0]  %s582, 1024, %s8, [#allocation4], 128, 128, 8
    $region41: #{tpu_custom_call.1} parent=1 // pred_fallthru
      _
    // Predicated region
    $region42: #{tpu_custom_call.1} parent=1 // pred_check
      _
    $region43: #{tpu_custom_call.1} parent=1 // pred_check_branch
      %589 = sbr.rel (0) target = $region45
    $region44: #{tpu_custom_call.1} parent=1 // pred_region
      %590 = dma.done [#allocation4], 1024
    $region45: #{tpu_custom_call.1} parent=1 // pred_fallthru
      _
    %591 = vsyncpa [#allocation3], 1
    %592 = vsyncpa [#allocation4], 1

</llo_original>
